<compile_context>
chip_gen: v6e
topology: v6e:2x2x1
jax: 0.10.0
libtpu: 0.0.40
codegen_flags: <defaults>
</compile_context>

<pallas_src>
import numpy as np
import jax
import jax.numpy as jnp
from jax.experimental import pallas as pl
from jax.experimental.pallas import tpu as pltpu

# ----------------------------------------------------------------------------
# Deterministic "parameters": diffusion schedule constants derived from r.
# ----------------------------------------------------------------------------
R = 4                                   # module hyperparameter (r=4)
_T = 1000                               # schedule length
_betas = np.linspace(1e-4, 0.02, _T, dtype=np.float64)
_ALPHA_BAR_R = float(np.prod(1.0 - _betas[: R + 1]))
SQRT_AB = float(np.sqrt(_ALPHA_BAR_R))            # sqrt(alpha_bar_r)
SQRT_1M_AB = float(np.sqrt(1.0 - _ALPHA_BAR_R))   # sqrt(1 - alpha_bar_r)

# ----------------------------------------------------------------------------
# Tiling constants.
# ----------------------------------------------------------------------------
_LANES = 1024            # lane-dense last dim (multiple of 128)
_MAX_TILE_ROWS = 512     # (512, 1024) f32 tile = 2 MiB per operand;
                         # 3 operands x 2 pipeline buffers = 12 MiB VMEM (v7x-safe)
_PALLAS_MIN_ELEMS = 1 << 16   # below ~256 KiB f32, plain XLA is strictly faster


def _round_up(x, m):
    return ((x + m - 1) // m) * m


# ----------------------------------------------------------------------------
# Pallas kernel: elementwise scale-and-add on the VPU (lane-dense 2D tiles).
# ----------------------------------------------------------------------------
def _diffuse_kernel(pc_ref, eps_ref, out_ref):
    # Compute in f32 (robust if inputs are bf16), cast at the store.
    x = pc_ref[...].astype(jnp.float32)
    e = eps_ref[...].astype(jnp.float32)
    out_ref[...] = (SQRT_AB * x + SQRT_1M_AB * e).astype(out_ref.dtype)


def gaussian_diffuse(pc, eps, *, force_pallas=False):
    """pc, eps: same-shaped float arrays -> diffused point cloud (same shape)."""
    orig_shape = pc.shape
    orig_dtype = pc.dtype
    total = int(np.prod(orig_shape))

    # Tiny inputs: a pallas_call launch + DMA overhead dwarfs the work and
    # blocks XLA fusion with surrounding ops.  Pure jnp is strictly faster.
    if total == 0 or (not force_pallas and total < _PALLAS_MIN_ELEMS):
        out = SQRT_AB * pc.astype(jnp.float32) + SQRT_1M_AB * eps.astype(jnp.float32)
        return out.astype(orig_dtype)

    # Flatten to a lane-dense (rows, LANES) layout; pad so tiles divide evenly.
    rows = pl.cdiv(total, _LANES)
    tile_rows = _MAX_TILE_ROWS if rows >= _MAX_TILE_ROWS else _round_up(rows, 8)
    rows_padded = _round_up(rows, tile_rows)
    padded_total = rows_padded * _LANES

    def _flatten(a):
        flat = a.reshape(-1)
        if padded_total != total:
            flat = jnp.pad(flat, (0, padded_total - total))
        return flat.reshape(rows_padded, _LANES)

    pc2 = _flatten(pc)
    eps2 = _flatten(eps)

    spec = pl.BlockSpec((tile_rows, _LANES), lambda i: (i, 0))
    out2 = pl.pallas_call(
        _diffuse_kernel,
        out_shape=jax.ShapeDtypeStruct((rows_padded, _LANES), orig_dtype),
        grid_spec=pltpu.PrefetchScalarGridSpec(
            num_scalar_prefetch=0,
            grid=(rows_padded // tile_rows,),
            in_specs=[spec, spec],
            out_specs=spec,
        ),
        compiler_params=pltpu.CompilerParams(
            dimension_semantics=("parallel",),   # shards across TCs on v7x
        ),
    )(pc2, eps2)

    return out2.reshape(-1)[:total].reshape(orig_shape)


class GaussianDiffuser:
    """JAX/Pallas port of the (empty-forward) PyTorch GaussianDiffuser."""

    def __init__(self, r=4):
        self.r = r
        betas = np.linspace(1e-4, 0.02, _T, dtype=np.float64)
        self.alpha_bar = float(np.prod(1.0 - betas[: r + 1]))

    def __call__(self, pc, key):
        eps = jax.random.normal(key, pc.shape, dtype=pc.dtype)
        return gaussian_diffuse(pc, eps)


if __name__ == "__main__":
    key = jax.random.PRNGKey(0)
    k_pc, k_eps, k_pc2, k_eps2 = jax.random.split(key, 4)

    # Small point cloud: batch=2, 2048 points, 3 coords.
    B, N, C = 2, 2048, 3
    pc = jax.random.normal(k_pc, (B, N, C), dtype=jnp.float32)
    eps = jax.random.normal(k_eps, (B, N, C), dtype=jnp.float32)

    # Exercise the Pallas path directly (force past the tiny-input fallback).
    out = gaussian_diffuse(pc, eps, force_pallas=True)
    out = jax.block_until_ready(out)
    assert out.shape == (B, N, C)
    assert out.dtype == jnp.float32

    ref = SQRT_AB * pc + SQRT_1M_AB * eps
    np.testing.assert_allclose(np.asarray(out), np.asarray(ref),
                               rtol=1e-6, atol=1e-6)

    # Larger run: multi-tile grid + auto-dispatch chooses the Pallas path.
    B2, N2, C2 = 4, 65536, 3
    pc_big = jax.random.normal(k_pc2, (B2, N2, C2), dtype=jnp.float32)
    eps_big = jax.random.normal(k_eps2, (B2, N2, C2), dtype=jnp.float32)
    out_big = jax.block_until_ready(gaussian_diffuse(pc_big, eps_big))
    ref_big = SQRT_AB * pc_big + SQRT_1M_AB * eps_big
    np.testing.assert_allclose(np.asarray(out_big), np.asarray(ref_big),
                               rtol=1e-6, atol=1e-6)

    # Module-style call (noise drawn from the key, same semantics).
    diffuser = GaussianDiffuser(r=R)
    out_mod = jax.block_until_ready(diffuser(pc, k_eps))
    np.testing.assert_allclose(np.asarray(out_mod), np.asarray(ref),
                               rtol=1e-6, atol=1e-6)

    print("KERNEL_OK")
</pallas_src>

<mosaic_0001>
module attributes {stable_mosaic.version = 11 : i64} {
  func.func @_diffuse_kernel(%arg0: i32, %arg1: memref<16x1024xf32, #tpu.memory_space<vmem>>, %arg2: memref<16x1024xf32, #tpu.memory_space<vmem>>, %arg3: memref<16x1024xf32, #tpu.memory_space<vmem>>) attributes {dimension_semantics = [#tpu.dimension_semantics<parallel>], iteration_bounds = array<i64: 1>, scalar_prefetch = 0 : i64, scratch_operands = 0 : i64, tpu.core_type = #tpu.core_type<tc>, window_params = [{transform_indices = @transform_0, window_bounds = array<i64: 16, 1024>}, {transform_indices = @transform_1, window_bounds = array<i64: 16, 1024>}, {transform_indices = @transform_2, window_bounds = array<i64: 16, 1024>}]} {
    %c0 = arith.constant 0 : index
    %c0_0 = arith.constant 0 : index
    %0 = vector.load %arg1[%c0, %c0_0] : memref<16x1024xf32, #tpu.memory_space<vmem>>, vector<16x1024xf32>
    %c0_1 = arith.constant 0 : index
    %c0_2 = arith.constant 0 : index
    %1 = vector.load %arg2[%c0_1, %c0_2] : memref<16x1024xf32, #tpu.memory_space<vmem>>, vector<16x1024xf32>
    %cst = arith.constant 0.999650418 : f32
    %2 = vector.broadcast %cst : f32 to vector<16x1024xf32>
    %3 = arith.mulf %2, %0 : vector<16x1024xf32>
    %cst_3 = arith.constant 0.0264387149 : f32
    %4 = vector.broadcast %cst_3 : f32 to vector<16x1024xf32>
    %5 = arith.mulf %4, %1 : vector<16x1024xf32>
    %6 = arith.addf %3, %5 : vector<16x1024xf32>
    %c0_4 = arith.constant 0 : index
    %c0_5 = arith.constant 0 : index
    %7 = vector.load %arg3[%c0_4, %c0_5] : memref<16x1024xf32, #tpu.memory_space<vmem>>, vector<16x1024xf32>
    tpu.vector_store %arg3[%c0_4, %c0_5], %6 {strides = array<i32>} : memref<16x1024xf32, #tpu.memory_space<vmem>>, vector<16x1024xf32>,
    return
  }
  func.func @transform_0(%arg0: i32) -> (i32, i32) {
    %c0_i32 = arith.constant 0 : i32
    %c0_i32_0 = arith.constant 0 : i32
    return %arg0, %c0_i32 : i32, i32
  }
  func.func @transform_1(%arg0: i32) -> (i32, i32) {
    %c0_i32 = arith.constant 0 : i32
    %c0_i32_0 = arith.constant 0 : i32
    return %arg0, %c0_i32 : i32, i32
  }
  func.func @transform_2(%arg0: i32) -> (i32, i32) {
    %c0_i32 = arith.constant 0 : i32
    %c0_i32_0 = arith.constant 0 : i32
    return %arg0, %c0_i32 : i32, i32
  }
}

</mosaic_0001>

<llo_original>
// kernel: tpu_custom_call.1
$region0: #{tpu_custom_call.1}
  #allocation0 [shape = 'u32[]', space=smem, size = 0x4, offset = 0x4, fixed_abs, tag = 'smem constant byte address 0x4 - core index']
  #allocation1 [shape = 'u32[144,128]{1,0:T(1,128)}', space=vmem, size = 0x12000, scoped, tag = 'internal scratch']
  %s0 = inlined_call_operand.hbm [shape: f32[16,1024], index: 0, kind: input, shape index: {}]
  %s1 = inlined_call_operand.hbm [shape: f32[16,1024], index: 1, kind: input, shape index: {}]
  %s2 = inlined_call_operand.hbm [shape: f32[16,1024], index: 2, kind: output, shape index: {}]
  %s3 = sld [smem:[#allocation0]]
  $region26: #{tpu_custom_call.1} parent=0
    _
  %s5 = ssub.s32 1, %s3
  %s6 = scalar_select 0, %s5, %s3
  $region1: #{tpu_custom_call.1} parent=0
    #allocation2 [shape = 'u8[65536]{0}', space=vmem, size = 0x10000, scoped, tag = 'input window, operand 0, single buffered']
    #allocation3 [shape = 's32[1]{0}', space=sflag, size = 0x4, scoped, tag = 'scoped memory for tpu_custom_call.1']
    #allocation4 [shape = 's32[1]{0}', space=sflag, size = 0x4, scoped, tag = 'scoped memory for tpu_custom_call.1']
    #allocation5 [shape = 'u8[65536]{0}', space=vmem, size = 0x10000, scoped, tag = 'input window, operand 1, single buffered']
    #allocation6 [shape = 's32[1]{0}', space=sflag, size = 0x4, scoped, tag = 'scoped memory for tpu_custom_call.1']
    #allocation7 [shape = 'u8[65536]{0}', space=vmem, size = 0x10000, scoped, tag = 'output window, operand 0, single buffered']
    %7 = vsyncpa [#allocation3], 0
    %8 = vsyncpa [#allocation6], 0
    %9 = vsyncpa [#allocation4], 0
    // Predicated region
    $region2: #{tpu_custom_call.1} parent=1 // pred_check
      _
    $region3: #{tpu_custom_call.1} parent=1 // pred_check_branch
      %11 = sbr.rel (0) target = $region5
    $region4: #{tpu_custom_call.1} parent=1 // pred_region
      %s13 = ssub.s32 2048, 2048
      %14 = vsyncadd [#allocation3], %s13
      %s15 = sshll.u32 [#allocation2], 4
      %s16 = int_to_ptr.vmem [resolvable:$true] %s15
      %21 = dma.hbm_to_vmem [thread:$0]  %s0, 2048, %s16, [#allocation3], 1024, 1024, 64
    $region5: #{tpu_custom_call.1} parent=1 // pred_fallthru
      _
    // Predicated region
    $region6: #{tpu_custom_call.1} parent=1 // pred_check
      _
    $region7: #{tpu_custom_call.1} parent=1 // pred_check_branch
      %23 = sbr.rel (0) target = $region9
    $region8: #{tpu_custom_call.1} parent=1 // pred_region
      %s25 = ssub.s32 2048, 2048
      %26 = vsyncadd [#allocation6], %s25
      %s27 = sshll.u32 [#allocation5], 4
      %s28 = int_to_ptr.vmem [resolvable:$true] %s27
      %33 = dma.hbm_to_vmem [thread:$0]  %s1, 2048, %s28, [#allocation6], 1024, 1024, 64
    $region9: #{tpu_custom_call.1} parent=1 // pred_fallthru
      _
    // Predicated region
    $region10: #{tpu_custom_call.1} parent=1 // pred_check
      _
    $region11: #{tpu_custom_call.1} parent=1 // pred_check_branch
      %35 = sbr.rel (0) target = $region13
    $region12: #{tpu_custom_call.1} parent=1 // pred_region
      %36 = dma.done [#allocation3], 2048
    $region13: #{tpu_custom_call.1} parent=1 // pred_fallthru
      _
    // Predicated region
    $region14: #{tpu_custom_call.1} parent=1 // pred_check
      _
    $region15: #{tpu_custom_call.1} parent=1 // pred_check_branch
      %38 = sbr.rel (0) target = $region17
    $region16: #{tpu_custom_call.1} parent=1 // pred_region
      %39 = dma.done [#allocation6], 2048
    $region17: #{tpu_custom_call.1} parent=1 // pred_fallthru
      _
    %v40 = vld [vmem:[#allocation2] sm:$0xff]
    %v41 = vld [vmem:[#allocation2 + $0x8] sm:$0xff]
    %v42 = vld [vmem:[#allocation2 + $0x10] sm:$0xff]
    %v43 = vld [vmem:[#allocation2 + $0x18] sm:$0xff]
    %v44 = vld [vmem:[#allocation2 + $0x20] sm:$0xff]
    %v45 = vld [vmem:[#allocation2 + $0x28] sm:$0xff]
    %v46 = vld [vmem:[#allocation2 + $0x30] sm:$0xff]
    %v47 = vld [vmem:[#allocation2 + $0x38] sm:$0xff]
    %v48 = vld [vmem:[#allocation2 + $0x40] sm:$0xff]
    %v49 = vld [vmem:[#allocation2 + $0x48] sm:$0xff]
    %v50 = vld [vmem:[#allocation2 + $0x50] sm:$0xff]
    %v51 = vld [vmem:[#allocation2 + $0x58] sm:$0xff]
    %v52 = vld [vmem:[#allocation2 + $0x60] sm:$0xff]
    %v53 = vld [vmem:[#allocation2 + $0x68] sm:$0xff]
    %v54 = vld [vmem:[#allocation2 + $0x70] sm:$0xff]
    %v55 = vld [vmem:[#allocation2 + $0x78] sm:$0xff]
    %v56 = vld [vmem:[#allocation5] sm:$0xff]
    %v57 = vld [vmem:[#allocation5 + $0x8] sm:$0xff]
    %v58 = vld [vmem:[#allocation5 + $0x10] sm:$0xff]
    %v59 = vld [vmem:[#allocation5 + $0x18] sm:$0xff]
    %v60 = vld [vmem:[#allocation5 + $0x20] sm:$0xff]
    %v61 = vld [vmem:[#allocation5 + $0x28] sm:$0xff]
    %v62 = vld [vmem:[#allocation5 + $0x30] sm:$0xff]
    %v63 = vld [vmem:[#allocation5 + $0x38] sm:$0xff]
    %v64 = vld [vmem:[#allocation5 + $0x40] sm:$0xff]
    %v65 = vld [vmem:[#allocation5 + $0x48] sm:$0xff]
    %v66 = vld [vmem:[#allocation5 + $0x50] sm:$0xff]
    %v67 = vld [vmem:[#allocation5 + $0x58] sm:$0xff]
    %v68 = vld [vmem:[#allocation5 + $0x60] sm:$0xff]
    %v69 = vld [vmem:[#allocation5 + $0x68] sm:$0xff]
    %v70 = vld [vmem:[#allocation5 + $0x70] sm:$0xff]
    %v71 = vld [vmem:[#allocation5 + $0x78] sm:$0xff]
    %v72 = vmul.f32 %v40, 0.9996504
    %v73 = vmul.f32 %v41, 0.9996504
    %v74 = vmul.f32 %v42, 0.9996504
    %v75 = vmul.f32 %v43, 0.9996504
    %v76 = vmul.f32 %v44, 0.9996504
    %v77 = vmul.f32 %v45, 0.9996504
    %v78 = vmul.f32 %v46, 0.9996504
    %v79 = vmul.f32 %v47, 0.9996504
    %v80 = vmul.f32 %v48, 0.9996504
    %v81 = vmul.f32 %v49, 0.9996504
    %v82 = vmul.f32 %v50, 0.9996504
    %v83 = vmul.f32 %v51, 0.9996504
    %v84 = vmul.f32 %v52, 0.9996504
    %v85 = vmul.f32 %v53, 0.9996504
    %v86 = vmul.f32 %v54, 0.9996504
    %v87 = vmul.f32 %v55, 0.9996504
    %v88 = vmul.f32 %v56, 0.026438715
    %v89 = vmul.f32 %v57, 0.026438715
    %v90 = vmul.f32 %v58, 0.026438715
    %v91 = vmul.f32 %v59, 0.026438715
    %v92 = vmul.f32 %v60, 0.026438715
    %v93 = vmul.f32 %v61, 0.026438715
    %v94 = vmul.f32 %v62, 0.026438715
    %v95 = vmul.f32 %v63, 0.026438715
    %v96 = vmul.f32 %v64, 0.026438715
    %v97 = vmul.f32 %v65, 0.026438715
    %v98 = vmul.f32 %v66, 0.026438715
    %v99 = vmul.f32 %v67, 0.026438715
    %v100 = vmul.f32 %v68, 0.026438715
    %v101 = vmul.f32 %v69, 0.026438715
    %v102 = vmul.f32 %v70, 0.026438715
    %v103 = vmul.f32 %v71, 0.026438715
    %v104 = vadd.f32 %v72, %v88
    %v105 = vadd.f32 %v73, %v89
    %v106 = vadd.f32 %v74, %v90
    %v107 = vadd.f32 %v75, %v91
    %v108 = vadd.f32 %v76, %v92
    %v109 = vadd.f32 %v77, %v93
    %v110 = vadd.f32 %v78, %v94
    %v111 = vadd.f32 %v79, %v95
    %v112 = vadd.f32 %v80, %v96
    %v113 = vadd.f32 %v81, %v97
    %v114 = vadd.f32 %v82, %v98
    %v115 = vadd.f32 %v83, %v99
    %v116 = vadd.f32 %v84, %v100
    %v117 = vadd.f32 %v85, %v101
    %v118 = vadd.f32 %v86, %v102
    %v119 = vadd.f32 %v87, %v103
    %120 = vst [vmem:[#allocation7] sm:$0xff] %v104
    %121 = vst [vmem:[#allocation7 + $0x8] sm:$0xff] %v105
    %122 = vst [vmem:[#allocation7 + $0x10] sm:$0xff] %v106
    %123 = vst [vmem:[#allocation7 + $0x18] sm:$0xff] %v107
    %124 = vst [vmem:[#allocation7 + $0x20] sm:$0xff] %v108
    %125 = vst [vmem:[#allocation7 + $0x28] sm:$0xff] %v109
    %126 = vst [vmem:[#allocation7 + $0x30] sm:$0xff] %v110
    %127 = vst [vmem:[#allocation7 + $0x38] sm:$0xff] %v111
    %128 = vst [vmem:[#allocation7 + $0x40] sm:$0xff] %v112
    %129 = vst [vmem:[#allocation7 + $0x48] sm:$0xff] %v113
    %130 = vst [vmem:[#allocation7 + $0x50] sm:$0xff] %v114
    %131 = vst [vmem:[#allocation7 + $0x58] sm:$0xff] %v115
    %132 = vst [vmem:[#allocation7 + $0x60] sm:$0xff] %v116
    %133 = vst [vmem:[#allocation7 + $0x68] sm:$0xff] %v117
    %134 = vst [vmem:[#allocation7 + $0x70] sm:$0xff] %v118
    %135 = vst [vmem:[#allocation7 + $0x78] sm:$0xff] %v119
    // Predicated region
    $region18: #{tpu_custom_call.1} parent=1 // pred_check
      _
    $region19: #{tpu_custom_call.1} parent=1 // pred_check_branch
      %137 = sbr.rel (0) target = $region21
    $region20: #{tpu_custom_call.1} parent=1 // pred_region
      %s139 = ssub.s32 2048, 2048
      %140 = vsyncadd [#allocation4], %s139
      %s141 = sshll.u32 [#allocation7], 4
      %s142 = int_to_ptr.vmem [resolvable:$true] %s141
      %147 = dma.vmem_to_hbm [thread:$0]  %s142, 2048, %s2, [#allocation4], 1024, 1024, 64
    $region21: #{tpu_custom_call.1} parent=1 // pred_fallthru
      _
    // Predicated region
    $region22: #{tpu_custom_call.1} parent=1 // pred_check
      _
    $region23: #{tpu_custom_call.1} parent=1 // pred_check_branch
      %149 = sbr.rel (0) target = $region25
    $region24: #{tpu_custom_call.1} parent=1 // pred_region
      %150 = dma.done [#allocation4], 2048
    $region25: #{tpu_custom_call.1} parent=1 // pred_fallthru
      _
    %151 = vsyncpa [#allocation3], 1
    %152 = vsyncpa [#allocation6], 1
    %153 = vsyncpa [#allocation4], 1

</llo_original>
